<compile_context>
chip_gen: v5e
topology: v5e:2x2
jax: 0.10.0
libtpu: 0.0.40
codegen_flags: <defaults>
</compile_context>

<pallas_src>
import jax
import jax.numpy as jnp
from jax import lax
from jax.experimental import pallas as pl
from jax.experimental.pallas import tpu as pltpu


_VMEM_LIMIT = 32 * 1024 * 1024     # explicit scoped-VMEM budget, safe on all gens
_ABS_CHUNK = 128                   # E-chunk for the |a-b| accumulation


def _round_up(x, m):
    return ((x + m - 1) // m) * m


# ----------------------------------------------------------------------------
# Kernel 1: fused embedding lookup + masked mean pooling over the sequence.
#   pooled[r] = sum_s mask[r,s] * emb[ids[r,s]] / clamp(sum_s mask[r,s], 1e-9)
# A (Rt, V) masked count matrix is built with a short static loop over S (no
# (Rt, S, V) one-hot temp) and contracted with the bf16 table on the MXU.
# ----------------------------------------------------------------------------
def _embed_pool_kernel(ids_ref, mask_ref, emb_ref, out_ref):
    ids = ids_ref[...]                                        # (Rt, S) int32
    mask = mask_ref[...]                                      # (Rt, S) f32
    emb = emb_ref[...]                                        # (V, E)  bf16
    Rt, S = ids.shape
    V = emb.shape[0]

    vocab = lax.broadcasted_iota(jnp.int32, (Rt, V), 1)
    counts = jnp.zeros((Rt, V), jnp.float32)
    for s in range(S):                                        # static, S is small
        counts = counts + jnp.where(ids[:, s:s + 1] == vocab,
                                    mask[:, s:s + 1], 0.0)

    pooled = jnp.dot(counts.astype(jnp.bfloat16), emb,
                     preferred_element_type=jnp.float32)      # (Rt, E)  MXU
    denom = jnp.maximum(jnp.sum(mask, axis=1, keepdims=True), 1e-9)
    out_ref[...] = pooled / denom


def embed_and_pool(ids, mask, emb_table):
    R, S = ids.shape
    V, E = emb_table.shape
    R8 = _round_up(max(R, 1), 8)
    Rt = R8 if R8 <= 64 else 64                 # Rt chosen so R_pad == R when possible
    R_pad = pl.cdiv(max(R, 1), Rt) * Rt
    if R_pad != R:
        ids = jnp.pad(ids, ((0, R_pad - R), (0, 0)))
        mask = jnp.pad(mask, ((0, R_pad - R), (0, 0)))

    out = pl.pallas_call(
        _embed_pool_kernel,
        out_shape=jax.ShapeDtypeStruct((R_pad, E), jnp.float32),
        grid=(R_pad // Rt,),
        in_specs=[
            pl.BlockSpec((Rt, S), lambda i: (i, 0)),
            pl.BlockSpec((Rt, S), lambda i: (i, 0)),
            pl.BlockSpec((V, E), lambda i: (0, 0)),            # constant block
        ],
        out_specs=pl.BlockSpec((Rt, E), lambda i: (i, 0)),
        compiler_params=pltpu.CompilerParams(
            dimension_semantics=("parallel",),
            vmem_limit_bytes=_VMEM_LIMIT),
    )(ids.astype(jnp.int32), mask.astype(jnp.float32),
      emb_table.astype(jnp.bfloat16))
    return out[:R]


# ----------------------------------------------------------------------------
# Kernel 2 (fused): pairwise scoring + softmaxes + block placement + edge
# weights, whole batch tile per grid step, lane-dense (…, 128) outputs.
#
# score[b,i,j] = w_col.fact_j + w_row.a_i + w_abs.|a_i - fact_j|
#              + w_prod.(a_i*fact_j) + bias
#   (product + column terms = ONE batched MXU matmul; row term rank-1; abs term
#    accumulated over E in chunks — no (rows, cols, E) full intermediate.)
#
# Placement of the narrow (rows, Nf)/(Nf, C) softmax blocks into the 128-lane
# node canvases is done with tiny one-hot placement matmuls on the MXU.
# ----------------------------------------------------------------------------
def _score_edge_kernel(scal_ref, hyp_ref, fact_ref, w_ref, aux_ref,
                       ew_ref, sim_ref):
    Bt, C, E = hyp_ref.shape
    Nf = fact_ref.shape[1]
    N = aux_ref.shape[2]
    L = ew_ref.shape[2]

    hyp = hyp_ref[...]                                        # (Bt, C, E)  f32
    fact = fact_ref[...]                                      # (Bt, Nf, E) f32
    w = w_ref[...]                                            # (8, E)      f32
    aux = aux_ref[...]                                        # (Bt, 4, N, L)

    wq_row, wq_col, wq_abs, wq_prod = w[0:1], w[1:2], w[2:3], w[3:4]
    wa_row, wa_col, wa_abs, wa_prod = w[4:5], w[5:6], w[6:7], w[7:8]

    p_aa_ov = scal_ref[0]
    p_aa_sim = scal_ref[1]
    p_qa_ov = scal_ref[2]
    p_qa_sim = scal_ref[3]
    bias_a = scal_ref[4]
    bias_q = scal_ref[5]

    fact_b16 = fact.astype(jnp.bfloat16)

    def pair_scores(a, w_row, w_col, w_abs, w_prod, bias):
        rows = a.shape[1]
        lhs = (a * w_prod + w_col).astype(jnp.bfloat16)       # (Bt, rows, E)
        mm = jnp.einsum('bie,bje->bij', lhs, fact_b16,
                        preferred_element_type=jnp.float32)   # (Bt, rows, Nf) MXU
        row_t = jnp.sum(a * w_row, axis=-1, keepdims=True)    # (Bt, rows, 1)
        abs_t = jnp.zeros((Bt, rows, Nf), jnp.float32)
        for c0 in range(0, E, _ABS_CHUNK):                    # bounded E-chunks
            ck = min(_ABS_CHUNK, E - c0)
            a_c = a[:, :, c0:c0 + ck]
            f_c = fact[:, :, c0:c0 + ck]
            w_c = w_abs[:, c0:c0 + ck]                        # (1, ck)
            abs_t = abs_t + jnp.sum(
                jnp.abs(a_c[:, :, None, :] - f_c[:, None, :, :])
                * w_c[:, None, None, :],
                axis=-1)
        return mm + row_t + abs_t + bias

    # --- abstract-abstract: softmax over the flattened Nf*Nf block (diagonal
    #     included in the normalisation, zeroed afterwards — as in reference).
    s_aa = pair_scores(fact, wa_row, wa_col, wa_abs, wa_prod, bias_a)
    m_aa = jnp.max(jnp.max(s_aa, axis=-1, keepdims=True), axis=-2, keepdims=True)
    e_aa = jnp.exp(s_aa - m_aa)
    tot_aa = jnp.sum(jnp.sum(e_aa, axis=-1, keepdims=True), axis=-2, keepdims=True)
    aa_soft = e_aa / tot_aa
    ri = lax.broadcasted_iota(jnp.int32, (Nf, Nf), 0)
    ci = lax.broadcasted_iota(jnp.int32, (Nf, Nf), 1)
    aa_soft = jnp.where((ri == ci)[None, :, :], 0.0, aa_soft)  # zero diagonal

    # --- question-abstract: per-choice softmax over the facts.
    s_qa = pair_scores(hyp, wq_row, wq_col, wq_abs, wq_prod, bias_q)
    m_q = jnp.max(s_qa, axis=-1, keepdims=True)
    e_q = jnp.exp(s_qa - m_q)
    sim = e_q / jnp.sum(e_q, axis=-1, keepdims=True)           # (Bt, C, Nf)

    # --- lane placement via tiny one-hot matmuls (MXU; no relayout scatters).
    pf_r = lax.broadcasted_iota(jnp.int32, (Nf, L), 0)
    pf_c = lax.broadcasted_iota(jnp.int32, (Nf, L), 1)
    p_fact = (pf_c == pf_r + C).astype(jnp.float32)            # fact j -> lane C+j
    pc_r = lax.broadcasted_iota(jnp.int32, (C, L), 0)
    pc_c = lax.broadcasted_iota(jnp.int32, (C, L), 1)
    p_choice = (pc_c == pc_r).astype(jnp.float32)              # choice c -> lane c

    sim_wide = jnp.dot(sim.reshape(Bt * C, Nf), p_fact,
                       preferred_element_type=jnp.float32).reshape(Bt, C, L)
    aa_wide = jnp.dot(aa_soft.reshape(Bt * Nf, Nf), p_fact,
                      preferred_element_type=jnp.float32).reshape(Bt, Nf, L)
    simT_nar = jnp.concatenate(
        [jnp.transpose(sim[b])[None, :, :] for b in range(Bt)], axis=0)  # (Bt,Nf,C)
    simT_wide = jnp.dot(simT_nar.reshape(Bt * Nf, C), p_choice,
                        preferred_element_type=jnp.float32).reshape(Bt, Nf, L)

    # --- assemble full-N-row, 128-lane canvases and the edge weights.
    qa_sim_canvas = jnp.concatenate([sim_wide, simT_wide], axis=1)        # (Bt,N,L)
    aa_soft_canvas = jnp.concatenate(
        [jnp.zeros((Bt, C, L), jnp.float32), aa_wide], axis=1)            # (Bt,N,L)

    row_n = lax.broadcasted_iota(jnp.int32, (N, L), 0)
    col_n = lax.broadcasted_iota(jnp.int32, (N, L), 1)
    aa_block = (row_n >= C) & (col_n >= C) & (col_n < N)

    aa_ov = aux[:, 0]
    aa_sim_in = aux[:, 1]
    qa_ov = aux[:, 2]
    qq = aux[:, 3]
    aa_sim_canvas = jnp.where(aa_block[None, :, :], aa_soft_canvas, aa_sim_in)

    ew_ref[...] = (-p_aa_ov * aa_ov
                   + p_aa_sim * aa_sim_canvas
                   + p_qa_ov * qa_ov
                   + p_qa_sim * qa_sim_canvas
                   + qq)
    sim_ref[...] = sim_wide


def score_and_edge_weights(hyp_seq, fact_seq, w_all, scalars, aux_slab):
    B, C, E = hyp_seq.shape
    Nf = fact_seq.shape[1]
    N = aux_slab.shape[2]
    L = aux_slab.shape[3]

    Bt = B if B <= 8 else 8
    B_pad = pl.cdiv(B, Bt) * Bt
    if B_pad != B:
        pad = B_pad - B
        hyp_seq = jnp.pad(hyp_seq, ((0, pad), (0, 0), (0, 0)))
        fact_seq = jnp.pad(fact_seq, ((0, pad), (0, 0), (0, 0)))
        aux_slab = jnp.pad(aux_slab, ((0, pad), (0, 0), (0, 0), (0, 0)))

    ew, sim = pl.pallas_call(
        _score_edge_kernel,
        out_shape=(jax.ShapeDtypeStruct((B_pad, N, L), jnp.float32),
                   jax.ShapeDtypeStruct((B_pad, C, L), jnp.float32)),
        grid=(B_pad // Bt,),
        in_specs=[
            pl.BlockSpec(memory_space=pltpu.MemorySpace.SMEM),      # scalars (6,)
            pl.BlockSpec((Bt, C, E), lambda i: (i, 0, 0)),          # hyp
            pl.BlockSpec((Bt, Nf, E), lambda i: (i, 0, 0)),         # fact
            pl.BlockSpec((8, E), lambda i: (0, 0)),                 # scoring weights
            pl.BlockSpec((Bt, 4, N, L), lambda i: (i, 0, 0, 0)),    # aux slab
        ],
        out_specs=(pl.BlockSpec((Bt, N, L), lambda i: (i, 0, 0)),
                   pl.BlockSpec((Bt, C, L), lambda i: (i, 0, 0))),
        compiler_params=pltpu.CompilerParams(
            dimension_semantics=("parallel",),
            vmem_limit_bytes=_VMEM_LIMIT),
    )(scalars, hyp_seq.astype(jnp.float32), fact_seq.astype(jnp.float32),
      w_all, aux_slab)
    return ew[:B], sim[:B]


# ----------------------------------------------------------------------------
# Model wrapper (parameter setup / reshapes / losses in plain JAX).
# ----------------------------------------------------------------------------
def _reorder_scoring_weight(w_flat, E):
    # slab rows: [w_row(=W[E:2E]), w_col(=W[:E]), w_abs(=W[2E:3E]), w_prod(=W[3E:4E])]
    # (reference concat order is (fact_col, row_node, |.|, prod) -> W[:E] is the col term)
    return jnp.stack([w_flat[E:2 * E], w_flat[0:E],
                      w_flat[2 * E:3 * E], w_flat[3 * E:4 * E]], axis=0)


class ContrastiveModelPallas:
    def __init__(self, num_nodes, emb_wi, hyp_max_len, fact_max_len,
                 w_embd_size=128, num_choices=4):
        self.num_nodes = num_nodes + 4
        self.num_choices = num_choices
        self.w_embd_size = w_embd_size
        self.hyp_max_len = hyp_max_len
        self.fact_max_len = fact_max_len
        self.emb_bf16 = jnp.asarray(emb_wi, jnp.float32).astype(jnp.bfloat16)

        E = w_embd_size
        bound = 1.0 / jnp.sqrt(4.0 * E)
        key = jax.random.PRNGKey(42)
        k1, k2, k3, k4 = jax.random.split(key, 4)
        # nn.Linear(4E, 1) weights/biases, deterministic init
        scoring_w = _reorder_scoring_weight(
            jax.random.uniform(k1, (4 * E,), jnp.float32, -bound, bound), E)
        self.scoring_b = jax.random.uniform(k2, (1,), jnp.float32, -bound, bound)
        abs_scoring_w = _reorder_scoring_weight(
            jax.random.uniform(k3, (4 * E,), jnp.float32, -bound, bound), E)
        self.abs_scoring_b = jax.random.uniform(k4, (1,), jnp.float32, -bound, bound)
        # (8, E): rows 0-3 question scorer, rows 4-7 abstract scorer
        self.w_all = jnp.concatenate([scoring_w, abs_scoring_w], axis=0)

        # scalar nn.Parameters, initialised to 1.0 as in the PyTorch module
        self.abstract_abstract_overlap_param = 1.0
        self.abstract_abstract_similarity_param = 1.0
        self.question_abstract_overlap_param = 1.0
        self.question_abstract_similarity_param = 1.0
        # grounding / fact-limit params exist in __init__ but only feed the
        # cvxpy constraints, so they do not affect the returned forward values.

    def forward(self, hypothesis_input_ids, hypothesis_attention_mask,
                fact_attention_mask, fact_input_ids,
                grounding_grounding_overlap, abstract_abstract_overlap,
                abstract_abstract_similarity, question_grounding_overlap,
                question_abstract_overlap, question_abstract_similarity,
                grounding_abstract_overlap, question_question_score,
                labels, gold_similarity_scores):
        E = self.w_embd_size
        C = self.num_choices
        N = self.num_nodes
        Nf = N - C

        # --- fused embedding lookup + masked mean pooling (Pallas kernel 1),
        #     facts and hypotheses merged into a single launch. --------------
        # TODO(synk): TransformerModel encoder not provided; embedding lookup only.
        fact_ids = fact_input_ids.reshape(-1, self.fact_max_len)
        fact_mask = fact_attention_mask.reshape(-1, self.fact_max_len)
        hyp_ids = hypothesis_input_ids.reshape(-1, self.hyp_max_len)
        hyp_mask = hypothesis_attention_mask.reshape(-1, self.hyp_max_len)

        S = max(self.fact_max_len, self.hyp_max_len)

        def pad_seq(x, s):
            return x if s == S else jnp.pad(x, ((0, 0), (0, S - s)))

        ids_all = jnp.concatenate(
            [pad_seq(fact_ids, self.fact_max_len),
             pad_seq(hyp_ids, self.hyp_max_len)], axis=0).astype(jnp.int32)
        mask_all = jnp.concatenate(
            [pad_seq(fact_mask.astype(jnp.float32), self.fact_max_len),
             pad_seq(hyp_mask.astype(jnp.float32), self.hyp_max_len)], axis=0)

        pooled = embed_and_pool(ids_all, mask_all, self.emb_bf16)
        Rf = fact_ids.shape[0]
        fact_seq = pooled[:Rf].reshape(-1, Nf, E)               # (B, Nf, E)
        hyp_seq = pooled[Rf:].reshape(-1, C, E)                 # (B, C, E)

        # --- pack the auxiliary canvases into one lane-padded slab -----------
        L = _round_up(N, 128)
        aux = jnp.stack([abstract_abstract_overlap, abstract_abstract_similarity,
                         question_abstract_overlap, question_question_score],
                        axis=1).astype(jnp.float32)             # (B, 4, N, N)
        aux = jnp.pad(aux, ((0, 0), (0, 0), (0, 0), (0, L - N)))

        scalars = jnp.concatenate([
            jnp.array([self.abstract_abstract_overlap_param,
                       self.abstract_abstract_similarity_param,
                       self.question_abstract_overlap_param,
                       self.question_abstract_similarity_param], jnp.float32),
            self.abs_scoring_b.astype(jnp.float32),
            self.scoring_b.astype(jnp.float32)], axis=0)        # (6,)

        # --- fused pairwise scoring + softmax + edge weights (Pallas kernel 2)
        ew_wide, sim_wide = score_and_edge_weights(
            hyp_seq, fact_seq, self.w_all, scalars, aux)
        edge_weights = ew_wide[:, :, :N]                        # (B, N, N)
        similarity_scores = sim_wide[:, :, C:C + Nf]            # (B, C, Nf)

        # --- cvxpy SDP surrogate ---------------------------------------------
        # TODO(synk): CvxpyLayer SDP solve has no Pallas equivalent; surrogate
        # mimics the "diag(edges[:4,:4]) sums to 1" constraint with a softmax
        # over per-choice edge-weight mass.
        choice_mass = jnp.sum(edge_weights[:, :C, :], axis=2)   # (B, C)
        final_pred = jax.nn.softmax(choice_mass, axis=1)

        # --- losses ----------------------------------------------------------
        gold = jax.nn.softmax(gold_similarity_scores, axis=2)
        mse = jnp.mean((similarity_scores - gold) ** 2)
        # nn.CrossEntropyLoss applies log_softmax to `final_pred` itself in the
        # reference (final_pred are the SDP diagonal values, not logits).
        log_probs = jax.nn.log_softmax(final_pred, axis=1)
        ce = -jnp.mean(jnp.take_along_axis(log_probs, labels[:, None], axis=1))
        return ce + mse, final_pred


if __name__ == "__main__":
    key = jax.random.PRNGKey(0)
    num_nodes_raw = 8                      # model's num_nodes = 12
    num_choices = 4
    N = num_nodes_raw + 4
    Nf = N - num_choices                   # 8 abstract fact nodes
    B = 2
    hyp_max_len = 8
    fact_max_len = 8
    E = 128
    V = 64

    keys = jax.random.split(key, 12)
    emb_wi = jax.random.normal(keys[0], (V, E), jnp.float32)

    model = ContrastiveModelPallas(num_nodes_raw, emb_wi, hyp_max_len,
                                   fact_max_len, w_embd_size=E,
                                   num_choices=num_choices)

    hyp_ids = jax.random.randint(keys[1], (B, num_choices, hyp_max_len), 0, V)
    hyp_mask = (jax.random.uniform(keys[2], (B, num_choices, hyp_max_len)) > 0.2
                ).astype(jnp.float32).at[..., 0].set(1.0)
    fact_ids = jax.random.randint(keys[3], (B, Nf, fact_max_len), 0, V)
    fact_mask = (jax.random.uniform(keys[4], (B, Nf, fact_max_len)) > 0.2
                 ).astype(jnp.float32).at[..., 0].set(1.0)

    aa_overlap = jax.random.uniform(keys[5], (B, N, N), jnp.float32)
    aa_similarity = jax.random.uniform(keys[6], (B, N, N), jnp.float32)
    qa_overlap = jax.random.uniform(keys[7], (B, N, N), jnp.float32)
    qa_similarity = jnp.zeros((B, N, N), jnp.float32)
    gg_overlap = jax.random.uniform(keys[8], (B, N, N), jnp.float32)
    qg_overlap = jax.random.uniform(keys[8], (B, N, N), jnp.float32)
    ga_overlap = jax.random.uniform(keys[9], (B, N, N), jnp.float32)
    qq_score = jax.random.uniform(keys[10], (B, N, N), jnp.float32)
    labels = jnp.array([0, 2], jnp.int32)
    gold_similarity_scores = jax.random.normal(keys[11], (B, num_choices, Nf),
                                               jnp.float32)

    loss, final_pred = model.forward(
        hyp_ids, hyp_mask, fact_mask, fact_ids,
        gg_overlap, aa_overlap, aa_similarity, qg_overlap,
        qa_overlap, qa_similarity, ga_overlap, qq_score,
        labels, gold_similarity_scores)

    jax.block_until_ready((loss, final_pred))
    print("KERNEL_OK")
</pallas_src>

<mosaic_0001>
module attributes {stable_mosaic.version = 11 : i64} {
  func.func @_embed_pool_kernel(%arg0: i32, %arg1: memref<24x8xi32, #tpu.memory_space<vmem>>, %arg2: memref<24x8xf32, #tpu.memory_space<vmem>>, %arg3: memref<64x128xbf16, #tpu.memory_space<vmem>>, %arg4: memref<24x128xf32, #tpu.memory_space<vmem>>) attributes {dimension_semantics = [#tpu.dimension_semantics<parallel>], iteration_bounds = array<i64: 1>, scalar_prefetch = 0 : i64, scratch_operands = 0 : i64, tpu.core_type = #tpu.core_type<tc>, window_params = [{transform_indices = @transform_0, window_bounds = array<i64: 24, 8>}, {transform_indices = @transform_1, window_bounds = array<i64: 24, 8>}, {pipeline_mode = #tpu.pipeline_mode<synchronous>, transform_indices = @transform_2, window_bounds = array<i64: 64, 128>}, {transform_indices = @transform_3, window_bounds = array<i64: 24, 128>}]} {
    %c0 = arith.constant 0 : index
    %c0_0 = arith.constant 0 : index
    %0 = vector.load %arg1[%c0, %c0_0] : memref<24x8xi32, #tpu.memory_space<vmem>>, vector<24x8xi32>
    %c0_1 = arith.constant 0 : index
    %c0_2 = arith.constant 0 : index
    %1 = vector.load %arg2[%c0_1, %c0_2] : memref<24x8xf32, #tpu.memory_space<vmem>>, vector<24x8xf32>
    %c0_3 = arith.constant 0 : index
    %c0_4 = arith.constant 0 : index
    %2 = vector.load %arg3[%c0_3, %c0_4] : memref<64x128xbf16, #tpu.memory_space<vmem>>, vector<64x128xbf16>
    %3 = tpu.iota {dimensions = array<i32: 1>} : vector<24x64xi32>
    %cst = arith.constant 0.000000e+00 : f32
    %4 = vector.broadcast %cst : f32 to vector<24x64xf32>
    %5 = vector.extract_strided_slice %0 {offsets = [0, 0], sizes = [24, 1], strides = [1, 1]} : vector<24x8xi32> to vector<24x1xi32>
    %6 = vector.broadcast %5 : vector<24x1xi32> to vector<24x64xi32>
    %7 = arith.cmpi eq, %6, %3 : vector<24x64xi32>
    %8 = vector.extract_strided_slice %1 {offsets = [0, 0], sizes = [24, 1], strides = [1, 1]} : vector<24x8xf32> to vector<24x1xf32>
    %cst_5 = arith.constant 0.000000e+00 : f32
    %9 = vector.shape_cast %8 : vector<24x1xf32> to vector<24x1xf32>
    %10 = vector.broadcast %9 : vector<24x1xf32> to vector<24x64xf32>
    %11 = vector.broadcast %cst_5 : f32 to vector<24x64xf32>
    %12 = arith.select %7, %10, %11 : vector<24x64xi1>, vector<24x64xf32>
    %13 = arith.addf %4, %12 : vector<24x64xf32>
    %14 = vector.extract_strided_slice %0 {offsets = [0, 1], sizes = [24, 1], strides = [1, 1]} : vector<24x8xi32> to vector<24x1xi32>
    %15 = vector.broadcast %14 : vector<24x1xi32> to vector<24x64xi32>
    %16 = arith.cmpi eq, %15, %3 : vector<24x64xi32>
    %17 = vector.extract_strided_slice %1 {offsets = [0, 1], sizes = [24, 1], strides = [1, 1]} : vector<24x8xf32> to vector<24x1xf32>
    %cst_6 = arith.constant 0.000000e+00 : f32
    %18 = vector.shape_cast %17 : vector<24x1xf32> to vector<24x1xf32>
    %19 = vector.broadcast %18 : vector<24x1xf32> to vector<24x64xf32>
    %20 = vector.broadcast %cst_6 : f32 to vector<24x64xf32>
    %21 = arith.select %16, %19, %20 : vector<24x64xi1>, vector<24x64xf32>
    %22 = arith.addf %13, %21 : vector<24x64xf32>
    %23 = vector.extract_strided_slice %0 {offsets = [0, 2], sizes = [24, 1], strides = [1, 1]} : vector<24x8xi32> to vector<24x1xi32>
    %24 = vector.broadcast %23 : vector<24x1xi32> to vector<24x64xi32>
    %25 = arith.cmpi eq, %24, %3 : vector<24x64xi32>
    %26 = vector.extract_strided_slice %1 {offsets = [0, 2], sizes = [24, 1], strides = [1, 1]} : vector<24x8xf32> to vector<24x1xf32>
    %cst_7 = arith.constant 0.000000e+00 : f32
    %27 = vector.shape_cast %26 : vector<24x1xf32> to vector<24x1xf32>
    %28 = vector.broadcast %27 : vector<24x1xf32> to vector<24x64xf32>
    %29 = vector.broadcast %cst_7 : f32 to vector<24x64xf32>
    %30 = arith.select %25, %28, %29 : vector<24x64xi1>, vector<24x64xf32>
    %31 = arith.addf %22, %30 : vector<24x64xf32>
    %32 = vector.extract_strided_slice %0 {offsets = [0, 3], sizes = [24, 1], strides = [1, 1]} : vector<24x8xi32> to vector<24x1xi32>
    %33 = vector.broadcast %32 : vector<24x1xi32> to vector<24x64xi32>
    %34 = arith.cmpi eq, %33, %3 : vector<24x64xi32>
    %35 = vector.extract_strided_slice %1 {offsets = [0, 3], sizes = [24, 1], strides = [1, 1]} : vector<24x8xf32> to vector<24x1xf32>
    %cst_8 = arith.constant 0.000000e+00 : f32
    %36 = vector.shape_cast %35 : vector<24x1xf32> to vector<24x1xf32>
    %37 = vector.broadcast %36 : vector<24x1xf32> to vector<24x64xf32>
    %38 = vector.broadcast %cst_8 : f32 to vector<24x64xf32>
    %39 = arith.select %34, %37, %38 : vector<24x64xi1>, vector<24x64xf32>
    %40 = arith.addf %31, %39 : vector<24x64xf32>
    %41 = vector.extract_strided_slice %0 {offsets = [0, 4], sizes = [24, 1], strides = [1, 1]} : vector<24x8xi32> to vector<24x1xi32>
    %42 = vector.broadcast %41 : vector<24x1xi32> to vector<24x64xi32>
    %43 = arith.cmpi eq, %42, %3 : vector<24x64xi32>
    %44 = vector.extract_strided_slice %1 {offsets = [0, 4], sizes = [24, 1], strides = [1, 1]} : vector<24x8xf32> to vector<24x1xf32>
    %cst_9 = arith.constant 0.000000e+00 : f32
    %45 = vector.shape_cast %44 : vector<24x1xf32> to vector<24x1xf32>
    %46 = vector.broadcast %45 : vector<24x1xf32> to vector<24x64xf32>
    %47 = vector.broadcast %cst_9 : f32 to vector<24x64xf32>
    %48 = arith.select %43, %46, %47 : vector<24x64xi1>, vector<24x64xf32>
    %49 = arith.addf %40, %48 : vector<24x64xf32>
    %50 = vector.extract_strided_slice %0 {offsets = [0, 5], sizes = [24, 1], strides = [1, 1]} : vector<24x8xi32> to vector<24x1xi32>
    %51 = vector.broadcast %50 : vector<24x1xi32> to vector<24x64xi32>
    %52 = arith.cmpi eq, %51, %3 : vector<24x64xi32>
    %53 = vector.extract_strided_slice %1 {offsets = [0, 5], sizes = [24, 1], strides = [1, 1]} : vector<24x8xf32> to vector<24x1xf32>
    %cst_10 = arith.constant 0.000000e+00 : f32
    %54 = vector.shape_cast %53 : vector<24x1xf32> to vector<24x1xf32>
    %55 = vector.broadcast %54 : vector<24x1xf32> to vector<24x64xf32>
    %56 = vector.broadcast %cst_10 : f32 to vector<24x64xf32>
    %57 = arith.select %52, %55, %56 : vector<24x64xi1>, vector<24x64xf32>
    %58 = arith.addf %49, %57 : vector<24x64xf32>
    %59 = vector.extract_strided_slice %0 {offsets = [0, 6], sizes = [24, 1], strides = [1, 1]} : vector<24x8xi32> to vector<24x1xi32>
    %60 = vector.broadcast %59 : vector<24x1xi32> to vector<24x64xi32>
    %61 = arith.cmpi eq, %60, %3 : vector<24x64xi32>
    %62 = vector.extract_strided_slice %1 {offsets = [0, 6], sizes = [24, 1], strides = [1, 1]} : vector<24x8xf32> to vector<24x1xf32>
    %cst_11 = arith.constant 0.000000e+00 : f32
    %63 = vector.shape_cast %62 : vector<24x1xf32> to vector<24x1xf32>
    %64 = vector.broadcast %63 : vector<24x1xf32> to vector<24x64xf32>
    %65 = vector.broadcast %cst_11 : f32 to vector<24x64xf32>
    %66 = arith.select %61, %64, %65 : vector<24x64xi1>, vector<24x64xf32>
    %67 = arith.addf %58, %66 : vector<24x64xf32>
    %68 = vector.extract_strided_slice %0 {offsets = [0, 7], sizes = [24, 1], strides = [1, 1]} : vector<24x8xi32> to vector<24x1xi32>
    %69 = vector.broadcast %68 : vector<24x1xi32> to vector<24x64xi32>
    %70 = arith.cmpi eq, %69, %3 : vector<24x64xi32>
    %71 = vector.extract_strided_slice %1 {offsets = [0, 7], sizes = [24, 1], strides = [1, 1]} : vector<24x8xf32> to vector<24x1xf32>
    %cst_12 = arith.constant 0.000000e+00 : f32
    %72 = vector.shape_cast %71 : vector<24x1xf32> to vector<24x1xf32>
    %73 = vector.broadcast %72 : vector<24x1xf32> to vector<24x64xf32>
    %74 = vector.broadcast %cst_12 : f32 to vector<24x64xf32>
    %75 = arith.select %70, %73, %74 : vector<24x64xi1>, vector<24x64xf32>
    %76 = arith.addf %67, %75 : vector<24x64xf32>
    %77 = arith.truncf %76 : vector<24x64xf32> to vector<24x64xbf16>
    %cst_13 = arith.constant dense<0.000000e+00> : vector<24x128xf32>
    %78 = tpu.matmul %77, %2, %cst_13 {dimension_numbers = #tpu.dot_dimension_numbers<[1], [0], [0], [1], [0, 0, 1, 1], [], []>} : vector<24x64xbf16>, vector<64x128xbf16>, vector<24x128xf32> -> vector<24x128xf32>
    %cst_14 = arith.constant dense<0.000000e+00> : vector<24xf32>
    %79 = vector.multi_reduction <add>, %1, %cst_14 [1] : vector<24x8xf32> to vector<24xf32>
    %80 = vector.shape_cast %79 : vector<24xf32> to vector<24x1xf32>
    %cst_15 = arith.constant 9.99999971E-10 : f32
    %81 = vector.broadcast %cst_15 : f32 to vector<24x1xf32>
    %82 = arith.maximumf %80, %81 : vector<24x1xf32>
    %83 = vector.broadcast %82 : vector<24x1xf32> to vector<24x128xf32>
    %84 = arith.divf %78, %83 : vector<24x128xf32>
    %c0_16 = arith.constant 0 : index
    %c0_17 = arith.constant 0 : index
    %85 = vector.load %arg4[%c0_16, %c0_17] : memref<24x128xf32, #tpu.memory_space<vmem>>, vector<24x128xf32>
    tpu.vector_store %arg4[%c0_16, %c0_17], %84 {strides = array<i32>} : memref<24x128xf32, #tpu.memory_space<vmem>>, vector<24x128xf32>,
    return
  }
  func.func @transform_0(%arg0: i32) -> (i32, i32) {
    %c0_i32 = arith.constant 0 : i32
    %c0_i32_0 = arith.constant 0 : i32
    return %arg0, %c0_i32 : i32, i32
  }
  func.func @transform_1(%arg0: i32) -> (i32, i32) {
    %c0_i32 = arith.constant 0 : i32
    %c0_i32_0 = arith.constant 0 : i32
    return %arg0, %c0_i32 : i32, i32
  }
  func.func @transform_2(%arg0: i32) -> (i32, i32) {
    %c0_i32 = arith.constant 0 : i32
    %c0_i32_0 = arith.constant 0 : i32
    %c0_i32_1 = arith.constant 0 : i32
    return %c0_i32, %c0_i32_0 : i32, i32
  }
  func.func @transform_3(%arg0: i32) -> (i32, i32) {
    %c0_i32 = arith.constant 0 : i32
    %c0_i32_0 = arith.constant 0 : i32
    return %arg0, %c0_i32 : i32, i32
  }
}

</mosaic_0001>

<llo_original>
// kernel: tpu_custom_call.1
$region0: #{tpu_custom_call.1}
  #allocation0 [shape = 'u32[]', space=smem, size = 0x4, offset = 0x4, fixed_abs, tag = 'smem constant byte address 0x4 - core index']
  #allocation1 [shape = 'u32[72,128]{1,0:T(1,128)}', space=vmem, size = 0x9000, scoped, tag = 'internal scratch']
  %s0 = inlined_call_operand.vmem [shape: s32[24,8], index: 0, kind: input, shape index: {}]
  %s1 = inlined_call_operand.vmem [shape: f32[24,8], index: 1, kind: input, shape index: {}]
  %s2 = inlined_call_operand.vmem [shape: bf16[64,128], index: 2, kind: input, shape index: {}]
  %s3 = inlined_call_operand.hbm [shape: f32[24,128], index: 3, kind: output, shape index: {}]
  %s4 = sld [smem:[#allocation0]]
  $region22: #{tpu_custom_call.1} parent=0
    _
  %s6 = ssub.s32 1, %s4
  %s7 = scalar_select 0, %s6, %s4
  $region1: #{tpu_custom_call.1} parent=0
    #allocation2 [shape = 'u8[12288]{0}', space=vmem, size = 0x3000, scoped, tag = 'output window, operand 0, single buffered']
    #allocation3 [shape = 's32[1]{0}', space=sflag, size = 0x4, scoped, tag = 'scoped memory for tpu_custom_call.1']
    %8 = vsyncpa [#allocation3], 0
    // Predicated region
    $region2: #{tpu_custom_call.1} parent=1 // pred_check
      _
    $region3: #{tpu_custom_call.1} parent=1 // pred_check_branch
      %10 = sbr.rel (0) target = $region5
    $region4: #{tpu_custom_call.1} parent=1 // pred_region
      _
    $region5: #{tpu_custom_call.1} parent=1 // pred_fallthru
      _
    // Predicated region
    $region6: #{tpu_custom_call.1} parent=1 // pred_check
      _
    $region7: #{tpu_custom_call.1} parent=1 // pred_check_branch
      %12 = sbr.rel (0) target = $region9
    $region8: #{tpu_custom_call.1} parent=1 // pred_region
      _
    $region9: #{tpu_custom_call.1} parent=1 // pred_fallthru
      _
    // Predicated region
    $region10: #{tpu_custom_call.1} parent=1 // pred_check
      _
    $region11: #{tpu_custom_call.1} parent=1 // pred_check_branch
      %14 = sbr.rel (0) target = $region13
    $region12: #{tpu_custom_call.1} parent=1 // pred_region
      _
    $region13: #{tpu_custom_call.1} parent=1 // pred_fallthru
      _
    %v16 = vld [vmem:[%s0] sm:$0xff]
    %v17 = vld [vmem:[%s0 + $0x8] sm:$0xff]
    %v18 = vld [vmem:[%s0 + $0x10] sm:$0xff]
    %v19 = vld [vmem:[%s1] sm:$0xff]
    %v20 = vld [vmem:[%s1 + $0x8] sm:$0xff]
    %v21 = vld [vmem:[%s1 + $0x10] sm:$0xff]
    %v22 = vld [vmem:[%s2] sm:$0xf]
    %v23 = vld [vmem:[%s2 + $0x4] sm:$0xf]
    %v24 = vld [vmem:[%s2 + $0x8] sm:$0xf]
    %v25 = vld [vmem:[%s2 + $0xc] sm:$0xf]
    %v26 = vld [vmem:[%s2 + $0x10] sm:$0xf]
    %v27 = vld [vmem:[%s2 + $0x14] sm:$0xf]
    %v28 = vld [vmem:[%s2 + $0x18] sm:$0xf]
    %v29 = vld [vmem:[%s2 + $0x1c] sm:$0xf]
    %v30 = vlaneseq
    %v31 = vand.u32 %v30, 127
    %32 = vset.pattern.permute.xlu0 0
    %33 = vperm.xlu0 %32, %v16
    %v34 = vpop.permute.xlu0 %33
    %35 = vset.pattern.permute.xlu0 0
    %36 = vperm.xlu0 %35, %v17
    %v37 = vpop.permute.xlu0 %36
    %38 = vset.pattern.permute.xlu0 0
    %39 = vperm.xlu0 %38, %v18
    %v40 = vpop.permute.xlu0 %39
    %vm41 = vcmp.eq.s32.totalorder %v34, %v31
    %vm42 = vcmp.eq.s32.totalorder %v37, %v31
    %vm43 = vcmp.eq.s32.totalorder %v40, %v31
    %45 = vset.pattern.permute.xlu0 0
    %46 = vperm.xlu0 %45, %v19
    %v47 = vpop.permute.xlu0 %46
    %50 = vset.pattern.permute.xlu0 0
    %51 = vperm.xlu0 %50, %v20
    %v52 = vpop.permute.xlu0 %51
    %55 = vset.pattern.permute.xlu0 0
    %56 = vperm.xlu0 %55, %v21
    %v57 = vpop.permute.xlu0 %56
    %v59 = vsel %vm41, %v47, 0.0
    %v60 = vsel %vm42, %v52, 0.0
    %v61 = vsel %vm43, %v57, 0.0
    %v62 = vadd.f32 %v59, 0.0
    %v63 = vadd.f32 %v60, 0.0
    %v64 = vadd.f32 %v61, 0.0
    %65 = vset.pattern.permute.xlu0 1
    %66 = vperm.xlu0 %65, %v16
    %v67 = vpop.permute.xlu0 %66
    %68 = vset.pattern.permute.xlu0 1
    %69 = vperm.xlu0 %68, %v17
    %v70 = vpop.permute.xlu0 %69
    %71 = vset.pattern.permute.xlu0 1
    %72 = vperm.xlu0 %71, %v18
    %v73 = vpop.permute.xlu0 %72
    %vm74 = vcmp.eq.s32.totalorder %v67, %v31
    %vm75 = vcmp.eq.s32.totalorder %v70, %v31
    %vm76 = vcmp.eq.s32.totalorder %v73, %v31
    %77 = vset.pattern.permute.xlu0 1
    %78 = vperm.xlu0 %77, %v19
    %v79 = vpop.permute.xlu0 %78
    %81 = vset.pattern.permute.xlu0 1
    %82 = vperm.xlu0 %81, %v20
    %v83 = vpop.permute.xlu0 %82
    %85 = vset.pattern.permute.xlu0 1
    %86 = vperm.xlu0 %85, %v21
    %v87 = vpop.permute.xlu0 %86
    %v89 = vsel %vm74, %v79, 0.0
    %v90 = vsel %vm75, %v83, 0.0
    %v91 = vsel %vm76, %v87, 0.0
    %v92 = vadd.f32 %v62, %v89
    %v93 = vadd.f32 %v63, %v90
    %v94 = vadd.f32 %v64, %v91
    %95 = vset.pattern.permute.xlu0 2
    %96 = vperm.xlu0 %95, %v16
    %v97 = vpop.permute.xlu0 %96
    %98 = vset.pattern.permute.xlu0 2
    %99 = vperm.xlu0 %98, %v17
    %v100 = vpop.permute.xlu0 %99
    %101 = vset.pattern.permute.xlu0 2
    %102 = vperm.xlu0 %101, %v18
    %v103 = vpop.permute.xlu0 %102
    %vm104 = vcmp.eq.s32.totalorder %v97, %v31
    %vm105 = vcmp.eq.s32.totalorder %v100, %v31
    %vm106 = vcmp.eq.s32.totalorder %v103, %v31
    %107 = vset.pattern.permute.xlu0 2
    %108 = vperm.xlu0 %107, %v19
    %v109 = vpop.permute.xlu0 %108
    %111 = vset.pattern.permute.xlu0 2
    %112 = vperm.xlu0 %111, %v20
    %v113 = vpop.permute.xlu0 %112
    %115 = vset.pattern.permute.xlu0 2
    %116 = vperm.xlu0 %115, %v21
    %v117 = vpop.permute.xlu0 %116
    %v119 = vsel %vm104, %v109, 0.0
    %v120 = vsel %vm105, %v113, 0.0
    %v121 = vsel %vm106, %v117, 0.0
    %v122 = vadd.f32 %v92, %v119
    %v123 = vadd.f32 %v93, %v120
    %v124 = vadd.f32 %v94, %v121
    %125 = vset.pattern.permute.xlu0 3
    %126 = vperm.xlu0 %125, %v16
    %v127 = vpop.permute.xlu0 %126
    %128 = vset.pattern.permute.xlu0 3
    %129 = vperm.xlu0 %128, %v17
    %v130 = vpop.permute.xlu0 %129
    %131 = vset.pattern.permute.xlu0 3
    %132 = vperm.xlu0 %131, %v18
    %v133 = vpop.permute.xlu0 %132
    %vm134 = vcmp.eq.s32.totalorder %v127, %v31
    %vm135 = vcmp.eq.s32.totalorder %v130, %v31
    %vm136 = vcmp.eq.s32.totalorder %v133, %v31
    %137 = vset.pattern.permute.xlu0 3
    %138 = vperm.xlu0 %137, %v19
    %v139 = vpop.permute.xlu0 %138
    %141 = vset.pattern.permute.xlu0 3
    %142 = vperm.xlu0 %141, %v20
    %v143 = vpop.permute.xlu0 %142
    %145 = vset.pattern.permute.xlu0 3
    %146 = vperm.xlu0 %145, %v21
    %v147 = vpop.permute.xlu0 %146
    %v149 = vsel %vm134, %v139, 0.0
    %v150 = vsel %vm135, %v143, 0.0
    %v151 = vsel %vm136, %v147, 0.0
    %v152 = vadd.f32 %v122, %v149
    %v153 = vadd.f32 %v123, %v150
    %v154 = vadd.f32 %v124, %v151
    %155 = vset.pattern.permute.xlu0 4
    %156 = vperm.xlu0 %155, %v16
    %v157 = vpop.permute.xlu0 %156
    %158 = vset.pattern.permute.xlu0 4
    %159 = vperm.xlu0 %158, %v17
    %v160 = vpop.permute.xlu0 %159
    %161 = vset.pattern.permute.xlu0 4
    %162 = vperm.xlu0 %161, %v18
    %v163 = vpop.permute.xlu0 %162
    %vm164 = vcmp.eq.s32.totalorder %v157, %v31
    %vm165 = vcmp.eq.s32.totalorder %v160, %v31
    %vm166 = vcmp.eq.s32.totalorder %v163, %v31
    %167 = vset.pattern.permute.xlu0 4
    %168 = vperm.xlu0 %167, %v19
    %v169 = vpop.permute.xlu0 %168
    %171 = vset.pattern.permute.xlu0 4
    %172 = vperm.xlu0 %171, %v20
    %v173 = vpop.permute.xlu0 %172
    %175 = vset.pattern.permute.xlu0 4
    %176 = vperm.xlu0 %175, %v21
    %v177 = vpop.permute.xlu0 %176
    %v179 = vsel %vm164, %v169, 0.0
    %v180 = vsel %vm165, %v173, 0.0
    %v181 = vsel %vm166, %v177, 0.0
    %v182 = vadd.f32 %v152, %v179
    %v183 = vadd.f32 %v153, %v180
    %v184 = vadd.f32 %v154, %v181
    %185 = vset.pattern.permute.xlu0 5
    %186 = vperm.xlu0 %185, %v16
    %v187 = vpop.permute.xlu0 %186
    %188 = vset.pattern.permute.xlu0 5
    %189 = vperm.xlu0 %188, %v17
    %v190 = vpop.permute.xlu0 %189
    %191 = vset.pattern.permute.xlu0 5
    %192 = vperm.xlu0 %191, %v18
    %v193 = vpop.permute.xlu0 %192
    %vm194 = vcmp.eq.s32.totalorder %v187, %v31
    %vm195 = vcmp.eq.s32.totalorder %v190, %v31
    %vm196 = vcmp.eq.s32.totalorder %v193, %v31
    %197 = vset.pattern.permute.xlu0 5
    %198 = vperm.xlu0 %197, %v19
    %v199 = vpop.permute.xlu0 %198
    %201 = vset.pattern.permute.xlu0 5
    %202 = vperm.xlu0 %201, %v20
    %v203 = vpop.permute.xlu0 %202
    %205 = vset.pattern.permute.xlu0 5
    %206 = vperm.xlu0 %205, %v21
    %v207 = vpop.permute.xlu0 %206
    %v209 = vsel %vm194, %v199, 0.0
    %v210 = vsel %vm195, %v203, 0.0
    %v211 = vsel %vm196, %v207, 0.0
    %v212 = vadd.f32 %v182, %v209
    %v213 = vadd.f32 %v183, %v210
    %v214 = vadd.f32 %v184, %v211
    %215 = vset.pattern.permute.xlu0 6
    %216 = vperm.xlu0 %215, %v16
    %v217 = vpop.permute.xlu0 %216
    %218 = vset.pattern.permute.xlu0 6
    %219 = vperm.xlu0 %218, %v17
    %v220 = vpop.permute.xlu0 %219
    %221 = vset.pattern.permute.xlu0 6
    %222 = vperm.xlu0 %221, %v18
    %v223 = vpop.permute.xlu0 %222
    %vm224 = vcmp.eq.s32.totalorder %v217, %v31
    %vm225 = vcmp.eq.s32.totalorder %v220, %v31
    %vm226 = vcmp.eq.s32.totalorder %v223, %v31
    %227 = vset.pattern.permute.xlu0 6
    %228 = vperm.xlu0 %227, %v19
    %v229 = vpop.permute.xlu0 %228
    %231 = vset.pattern.permute.xlu0 6
    %232 = vperm.xlu0 %231, %v20
    %v233 = vpop.permute.xlu0 %232
    %235 = vset.pattern.permute.xlu0 6
    %236 = vperm.xlu0 %235, %v21
    %v237 = vpop.permute.xlu0 %236
    %v239 = vsel %vm224, %v229, 0.0
    %v240 = vsel %vm225, %v233, 0.0
    %v241 = vsel %vm226, %v237, 0.0
    %v242 = vadd.f32 %v212, %v239
    %v243 = vadd.f32 %v213, %v240
    %v244 = vadd.f32 %v214, %v241
    %245 = vset.pattern.permute.xlu0 7
    %246 = vperm.xlu0 %245, %v16
    %v247 = vpop.permute.xlu0 %246
    %248 = vset.pattern.permute.xlu0 7
    %249 = vperm.xlu0 %248, %v17
    %v250 = vpop.permute.xlu0 %249
    %251 = vset.pattern.permute.xlu0 7
    %252 = vperm.xlu0 %251, %v18
    %v253 = vpop.permute.xlu0 %252
    %vm254 = vcmp.eq.s32.totalorder %v247, %v31
    %vm255 = vcmp.eq.s32.totalorder %v250, %v31
    %vm256 = vcmp.eq.s32.totalorder %v253, %v31
    %257 = vset.pattern.permute.xlu0 7
    %258 = vperm.xlu0 %257, %v19
    %v259 = vpop.permute.xlu0 %258
    %261 = vset.pattern.permute.xlu0 7
    %262 = vperm.xlu0 %261, %v20
    %v263 = vpop.permute.xlu0 %262
    %265 = vset.pattern.permute.xlu0 7
    %266 = vperm.xlu0 %265, %v21
    %v267 = vpop.permute.xlu0 %266
    %v269 = vsel %vm254, %v259, 0.0
    %v270 = vsel %vm255, %v263, 0.0
    %v271 = vsel %vm256, %v267, 0.0
    %v272 = vadd.f32 %v242, %v269
    %v273 = vadd.f32 %v243, %v270
    %v274 = vadd.f32 %v244, %v271
    %v275 = vpack.c.bf16 %v273, %v272
    %v276 = vpack.c.bf16 %v274, %v274
    %v285 = vunpack.c.l.b16 %v22
    %v286 = vunpack.c.l.b16 %v23
    %v287 = vunpack.c.l.b16 %v24
    %v288 = vunpack.c.l.b16 %v25
    %v289 = vunpack.c.l.b16 %v26
    %v290 = vunpack.c.l.b16 %v27
    %v291 = vunpack.c.l.b16 %v28
    %v292 = vunpack.c.l.b16 %v29
    %v293 = vpack.c.b16 %v286, %v285
    %v294 = vpack.c.b16 %v288, %v287
    %v295 = vpack.c.b16 %v290, %v289
    %v296 = vpack.c.b16 %v292, %v291
    %vm301 = vcmask 523264
    %v303 = vsel %vm301, %v275, 0
    %v306 = vsel %vm301, %v276, 0
    %308 = vmatpush.bf16.msra.mxu0 0
    %309 = vmatpush.bf16.msra.mxu0 0
    %310 = vmatpush.bf16.msra.mxu0 0
    %311 = vmatpush.bf16.msra.mxu0 0
    %312 = vmatpush.bf16.msra.mxu0 %v296
    %313 = vmatpush.bf16.msra.mxu0 %v295
    %314 = vmatpush.bf16.msra.mxu0 %v294
    %315 = vmatpush.bf16.msra.mxu0 %v293
    %316 = vmatmul.bf16.gmra.mxu0 %v303
    %v317 = vpop.f32.mrf.mxu0
    %v318 = vadd.f32 0.0, %v317
    %v319 = vpop.f32.mrf.mxu0
    %v320 = vadd.f32 0.0, %v319
    %321 = vmatmul.bf16.gmra.mxu0 %v306
    %v322 = vpop.f32.mrf.mxu0
    %v323 = vadd.f32 0.0, %v322
    %v324 = vpop.f32.mrf.mxu0
    %325 = vdwg.mxu0
    %vm326 = vcmask 64512
    %v327 = vsel %vm326, %v19, 0.0
    %328 = vadd.xlane.f32.xlu0 %v327
    %v329 = vpop.xlane.xlu0 %328
    %v330 = vsel %vm326, %v20, 0.0
    %331 = vadd.xlane.f32.xlu0 %v330
    %v332 = vpop.xlane.xlu0 %331
    %v333 = vsel %vm326, %v21, 0.0
    %334 = vadd.xlane.f32.xlu0 %v333
    %v335 = vpop.xlane.xlu0 %334
    %v336 = vmax.f32 %v329, 1e-09
    %v337 = vmax.f32 %v332, 1e-09
    %v338 = vmax.f32 %v335, 1e-09
    %v339 = vrcp.pop %v336
    %v340 = vmul.f32 %v336, %v339
    %v341 = vsub.f32 1.0, %v340
    %v342 = vmul.f32 %v339, %v341
    %v343 = vadd.f32 %v339, %v342
    %vm344 = vweird.f32 %v336
    %vm345 = vweird.f32 %v339
    %vm346 = vmor %vm344, %vm345
    %v347 = vsel %vm346, %v339, %v343
    %v348 = vand.u32 2147483647, %v336
    %vm349 = vcmp.eq.f32.partialorder %v348, 8.507059e+37
    %v350 = vand.u32 %v336, 2147483648
    %v351 = vor.u32 1.1754944e-38, %v350
    %v352 = vsel %vm349, %v351, %v347
    %v353 = vmul.f32 %v318, %v352
    %v354 = vrcp.pop %v337
    %v355 = vmul.f32 %v337, %v354
    %v356 = vsub.f32 1.0, %v355
    %v357 = vmul.f32 %v354, %v356
    %v358 = vadd.f32 %v354, %v357
    %vm359 = vweird.f32 %v337
    %vm360 = vweird.f32 %v354
    %vm361 = vmor %vm359, %vm360
    %v362 = vsel %vm361, %v354, %v358
    %v363 = vand.u32 2147483647, %v337
    %vm364 = vcmp.eq.f32.partialorder %v363, 8.507059e+37
    %v365 = vand.u32 %v337, 2147483648
    %v366 = vor.u32 1.1754944e-38, %v365
    %v367 = vsel %vm364, %v366, %v362
    %v368 = vmul.f32 %v320, %v367
    %v369 = vrcp.pop %v338
    %v370 = vmul.f32 %v338, %v369
    %v371 = vsub.f32 1.0, %v370
    %v372 = vmul.f32 %v369, %v371
    %v373 = vadd.f32 %v369, %v372
    %vm374 = vweird.f32 %v338
    %vm375 = vweird.f32 %v369
    %vm376 = vmor %vm374, %vm375
    %v377 = vsel %vm376, %v369, %v373
    %v378 = vand.u32 2147483647, %v338
    %vm379 = vcmp.eq.f32.partialorder %v378, 8.507059e+37
    %v380 = vand.u32 %v338, 2147483648
    %v381 = vor.u32 1.1754944e-38, %v380
    %v382 = vsel %vm379, %v381, %v377
    %v383 = vmul.f32 %v323, %v382
    %384 = vst [vmem:[#allocation2] sm:$0xff] %v353
    %385 = vst [vmem:[#allocation2 + $0x8] sm:$0xff] %v368
    %386 = vst [vmem:[#allocation2 + $0x10] sm:$0xff] %v383
    // Predicated region
    $region14: #{tpu_custom_call.1} parent=1 // pred_check
      _
    $region15: #{tpu_custom_call.1} parent=1 // pred_check_branch
      %388 = sbr.rel (0) target = $region17
    $region16: #{tpu_custom_call.1} parent=1 // pred_region
      %390 = vsyncadd [#allocation3], 0
      %s391 = sshll.u32 [#allocation2], 4
      %s392 = int_to_ptr.vmem [resolvable:$true] %s391
      %s393 = sshll.u32 %s3, 4
      %s394 = int_to_ptr.hbm [resolvable:$true] %s393
      %399 = dma.vmem_to_hbm [thread:$0]  %s392, 384, %s394, [#allocation3], 128, 128, 8
    $region17: #{tpu_custom_call.1} parent=1 // pred_fallthru
      _
    // Predicated region
    $region18: #{tpu_custom_call.1} parent=1 // pred_check
      _
    $region19: #{tpu_custom_call.1} parent=1 // pred_check_branch
      %401 = sbr.rel (0) target = $region21
    $region20: #{tpu_custom_call.1} parent=1 // pred_region
      %403 = dma.done [#allocation3], 384
    $region21: #{tpu_custom_call.1} parent=1 // pred_fallthru
      _
    %404 = vsyncpa [#allocation3], 1

</llo_original>
